<compile_context>
chip_gen: v6e
topology: v6e:2x2x1
jax: 0.10.0
libtpu: 0.0.40
codegen_flags: <defaults>
</compile_context>

<pallas_src>
import functools

import jax
import jax.numpy as jnp
from jax.experimental import pallas as pl
from jax.experimental.pallas import tpu as pltpu

HIDDEN = 128          # demo hidden size (lane-aligned); any H works, 128-multiples are best
MAX_BATCH_TILE = 256  # upper bound on batch rows per grid step


# ------------------------------ fused kernel ------------------------------
def _attention_kernel(enc_ref, hid_ref, v_enc_ref, v_hid_ref, c_ref, out_ref,
                      *, total_rows, batch_tile):
    # scores[b,s] = enc[b,s,:]·v_enc  (folded l1..l4·w; elementwise mul + lane reduce)
    scores = jnp.sum(enc_ref[...].astype(jnp.float32) * v_enc_ref[...],
                     axis=-1, keepdims=True)                          # (tb, S, 1) f32

    # per-row hidden-state contribution (constant over S; kept so the kernel
    # computes exactly the module's scores, not only their softmax class)
    hid_term = jnp.sum(hid_ref[...].astype(jnp.float32) * v_hid_ref[...],
                       axis=-1, keepdims=True) + c_ref[0]             # (tb, 1)
    scores = scores + hid_term[:, :, None]

    # mask tail rows of a ragged last tile (generated only when needed; the
    # garbage rows stay confined to their own row and are sliced off outside)
    if total_rows % batch_tile != 0:
        row = (pl.program_id(0) * batch_tile
               + jax.lax.broadcasted_iota(jnp.int32, (scores.shape[0], 1, 1), 0))
        scores = jnp.where(row < total_rows, scores, 0.0)

    # numerically-stable softmax over the sequence (sublane) axis, f32
    m = jnp.max(scores, axis=1, keepdims=True)
    e = jnp.exp(scores - m)
    aw = e * pl.reciprocal(jnp.sum(e, axis=1, keepdims=True), approx=True)  # (tb, S, 1)

    # context = bmm(attention_weights, encoder_outputs): weighted sum over seq.
    # enc_ref re-read here (cheap vld from the already-resident VMEM block).
    out_ref[...] = jnp.sum(aw * enc_ref[...].astype(jnp.float32), axis=1)   # (tb, H)


# ------------------------------ wrapper ------------------------------
def _pick_batch_tile(B, S, H, enc_bytes):
    # per batch row: 2 pipelined enc buffers + ~2 f32 working copies in-kernel
    per_row = S * H * (2 * enc_bytes + 2 * 4)
    budget = 12 << 20          # conservative: fits every gen's default scoped VMEM
    cap = max(1, min(MAX_BATCH_TILE, budget // per_row))
    if cap >= B:
        return B               # single full-extent block (always layout-legal)
    return min(max(8, (cap // 8) * 8), B)   # sublane-aligned when actually tiling


def attention_forward(hidden_state, encoder_outputs, folded_params):
    """hidden_state: (B, H) (or anything reshapeable to it), encoder_outputs:
    (B, S, H).  folded_params from fold_params().  Returns context (B, H) f32."""
    B, S, H = encoder_outputs.shape
    hid = hidden_state.reshape(B, H)     # mirrors .view(batch_size, 1, feat_n)

    # dominant HBM stream in bf16 (ideally the producer already stores bf16,
    # making this cast a no-op)
    if encoder_outputs.dtype != jnp.bfloat16:
        encoder_outputs = encoder_outputs.astype(jnp.bfloat16)

    batch_tile = _pick_batch_tile(B, S, H, encoder_outputs.dtype.itemsize)
    num_tiles = pl.cdiv(B, batch_tile)
    # NOTE(v7x): >=2 (ideally even) batch tiles keep both TensorCores busy;
    # for tiny B (like the demo) a single tile / single core is accepted.

    kernel = functools.partial(_attention_kernel,
                               total_rows=B, batch_tile=batch_tile)
    vec_spec = pl.BlockSpec((1, H), lambda i: (0, 0))    # resident in VMEM

    return pl.pallas_call(
        kernel,
        grid=(num_tiles,),
        out_shape=jax.ShapeDtypeStruct((B, H), jnp.float32),
        in_specs=[
            pl.BlockSpec((batch_tile, S, H), lambda i: (i, 0, 0)),   # encoder_outputs
            pl.BlockSpec((batch_tile, H), lambda i: (i, 0)),         # hidden_state
            vec_spec,                                                # v_enc
            vec_spec,                                                # v_hid
            pl.BlockSpec(memory_space=pltpu.MemorySpace.SMEM),       # c (scalar)
        ],
        out_specs=pl.BlockSpec((batch_tile, H), lambda i: (i, 0)),
        compiler_params=pltpu.CompilerParams(
            dimension_semantics=("parallel",),   # independent batch tiles
        ),
    )(encoder_outputs, hid,
      folded_params["v_enc"], folded_params["v_hid"], folded_params["c"])


# ------------------------------ params ------------------------------
def init_params(key, hidden_size=HIDDEN):
    """PyTorch-style uniform init of the original module's weights (all f32)."""
    h = hidden_size
    ks = jax.random.split(key, 9)
    s1 = 1.0 / float(jnp.sqrt(2.0 * h))   # l1: fan_in = 2H
    s2 = 1.0 / float(jnp.sqrt(1.0 * h))   # l2..l4, w: fan_in = H

    def u(k, shape, s):
        return jax.random.uniform(k, shape, jnp.float32, -s, s)

    return {
        "W1": u(ks[0], (h, 2 * h), s1), "b1": u(ks[1], (h,), s1),
        "W2": u(ks[2], (h, h), s2),     "b2": u(ks[3], (h,), s2),
        "W3": u(ks[4], (h, h), s2),     "b3": u(ks[5], (h,), s2),
        "W4": u(ks[6], (h, h), s2),     "b4": u(ks[7], (h,), s2),
        "Wv": u(ks[8], (1, h), s2),     # Linear(H, 1, bias=False)
    }


def fold_params(p):
    """Collapse the affine chain l1 -> l2 -> l3 -> l4 -> w once, in f32:
       scores[b,s] = enc[b,s,:]·v_enc + hid[b,:]·v_hid + c."""
    H = p["W2"].shape[0]
    wv = p["Wv"][0]                                  # (H,)
    u3 = p["W4"].T @ wv
    c = jnp.dot(p["b4"], wv)
    u2 = p["W3"].T @ u3
    c = c + jnp.dot(p["b3"], u3)
    u1 = p["W2"].T @ u2
    c = c + jnp.dot(p["b2"], u2)
    v_enc = p["W1"][:, :H].T @ u1                    # encoder half of l1
    v_hid = p["W1"][:, H:].T @ u1                    # hidden half of l1
    c = c + jnp.dot(p["b1"], u1)
    return {"v_enc": v_enc.reshape(1, H).astype(jnp.float32),
            "v_hid": v_hid.reshape(1, H).astype(jnp.float32),
            "c": jnp.reshape(c, (1,)).astype(jnp.float32)}


# ------------------------------ pure-JAX reference ------------------------------
def attention_reference(hidden_state, encoder_outputs, p):
    B, S, H = encoder_outputs.shape
    hid = jnp.broadcast_to(hidden_state.reshape(B, 1, H), (B, S, H))
    z = jnp.concatenate([encoder_outputs, hid], axis=2).reshape(-1, 2 * H)
    x = z @ p["W1"].T + p["b1"]
    x = x @ p["W2"].T + p["b2"]
    x = x @ p["W3"].T + p["b3"]
    x = x @ p["W4"].T + p["b4"]
    s = (x @ p["Wv"].T).reshape(B, S)
    aw = jax.nn.softmax(s, axis=1)
    return jnp.einsum("bs,bsh->bh", aw, encoder_outputs)


if __name__ == "__main__":
    key = jax.random.PRNGKey(0)
    k_enc, k_hid, k_p = jax.random.split(key, 3)

    B, S, H = 2, 8, HIDDEN
    # activations stored bf16 (dominant HBM stream), hidden state f32
    encoder_outputs = jax.random.normal(k_enc, (B, S, H), jnp.float32).astype(jnp.bfloat16)
    hidden_state = jax.random.normal(k_hid, (B, H), jnp.float32)

    params = init_params(k_p, H)
    folded = fold_params(params)

    context = attention_forward(hidden_state, encoder_outputs, folded)
    jax.block_until_ready(context)

    assert context.shape == (B, H)
    assert bool(jnp.all(jnp.isfinite(context)))

    # validate the offline folding + bf16 streaming against the unfolded f32
    # reference of the original module (same bf16-quantized enc data)
    ref = attention_reference(hidden_state, encoder_outputs.astype(jnp.float32), params)
    max_err = float(jnp.max(jnp.abs(context - ref)))
    assert max_err < 2e-2, f"max |kernel - reference| = {max_err}"

    print("KERNEL_OK")
</pallas_src>

<mosaic_0001>
module attributes {stable_mosaic.version = 11 : i64} {
  func.func @_attention_kernel(%arg0: i32, %arg1: memref<2x8x128xbf16, #tpu.memory_space<vmem>>, %arg2: memref<2x128xf32, #tpu.memory_space<vmem>>, %arg3: memref<1x128xf32, #tpu.memory_space<vmem>>, %arg4: memref<1x128xf32, #tpu.memory_space<vmem>>, %arg5: memref<1xf32, #tpu.memory_space<smem>>, %arg6: memref<2x128xf32, #tpu.memory_space<vmem>>) attributes {dimension_semantics = [#tpu.dimension_semantics<parallel>], iteration_bounds = array<i64: 1>, scalar_prefetch = 0 : i64, scratch_operands = 0 : i64, tpu.core_type = #tpu.core_type<tc>, window_params = [{transform_indices = @transform_0, window_bounds = array<i64: 2, 8, 128>}, {transform_indices = @transform_1, window_bounds = array<i64: 2, 128>}, {pipeline_mode = #tpu.pipeline_mode<synchronous>, transform_indices = @transform_2, window_bounds = array<i64: 1, 128>}, {pipeline_mode = #tpu.pipeline_mode<synchronous>, transform_indices = @transform_3, window_bounds = array<i64: 1, 128>}, {transform_indices = @transform_4, window_bounds = array<i64: 1>}, {transform_indices = @transform_5, window_bounds = array<i64: 2, 128>}]} {
    %c0 = arith.constant 0 : index
    %c0_0 = arith.constant 0 : index
    %c0_1 = arith.constant 0 : index
    %0 = vector.load %arg1[%c0, %c0_0, %c0_1] : memref<2x8x128xbf16, #tpu.memory_space<vmem>>, vector<2x8x128xbf16>
    %1 = arith.extf %0 : vector<2x8x128xbf16> to vector<2x8x128xf32>
    %c0_2 = arith.constant 0 : index
    %c0_3 = arith.constant 0 : index
    %2 = vector.load %arg3[%c0_2, %c0_3] : memref<1x128xf32, #tpu.memory_space<vmem>>, vector<1x128xf32>
    %3 = vector.shape_cast %2 : vector<1x128xf32> to vector<1x1x128xf32>
    %4 = vector.broadcast %3 : vector<1x1x128xf32> to vector<2x8x128xf32>
    %5 = arith.mulf %1, %4 : vector<2x8x128xf32>
    %cst = arith.constant dense<0.000000e+00> : vector<2x8xf32>
    %6 = vector.multi_reduction <add>, %5, %cst [2] : vector<2x8x128xf32> to vector<2x8xf32>
    %7 = vector.shape_cast %6 : vector<2x8xf32> to vector<2x8x1xf32>
    %c0_4 = arith.constant 0 : index
    %c0_5 = arith.constant 0 : index
    %8 = vector.load %arg2[%c0_4, %c0_5] : memref<2x128xf32, #tpu.memory_space<vmem>>, vector<2x128xf32>
    %c0_6 = arith.constant 0 : index
    %c0_7 = arith.constant 0 : index
    %9 = vector.load %arg4[%c0_6, %c0_7] : memref<1x128xf32, #tpu.memory_space<vmem>>, vector<1x128xf32>
    %10 = vector.broadcast %9 : vector<1x128xf32> to vector<2x128xf32>
    %11 = arith.mulf %8, %10 : vector<2x128xf32>
    %cst_8 = arith.constant dense<0.000000e+00> : vector<2xf32>
    %12 = vector.multi_reduction <add>, %11, %cst_8 [1] : vector<2x128xf32> to vector<2xf32>
    %13 = vector.shape_cast %12 : vector<2xf32> to vector<2x1xf32>
    %c0_9 = arith.constant 0 : index
    %14 = memref.load %arg5[%c0_9] : memref<1xf32, #tpu.memory_space<smem>>
    %15 = vector.broadcast %14 : f32 to vector<2x1xf32>
    %16 = arith.addf %13, %15 : vector<2x1xf32>
    %17 = vector.shape_cast %16 : vector<2x1xf32> to vector<2x1x1xf32>
    %18 = vector.broadcast %17 : vector<2x1x1xf32> to vector<2x8x1xf32>
    %19 = arith.addf %7, %18 : vector<2x8x1xf32>
    %cst_10 = arith.constant dense<0xFF800000> : vector<2x1xf32>
    %20 = vector.multi_reduction <maximumf>, %19, %cst_10 [1] : vector<2x8x1xf32> to vector<2x1xf32>
    %21 = vector.shape_cast %20 : vector<2x1xf32> to vector<2x1x1xf32>
    %22 = vector.broadcast %21 : vector<2x1x1xf32> to vector<2x8x1xf32>
    %23 = arith.subf %19, %22 : vector<2x8x1xf32>
    %24 = math.exp %23 : vector<2x8x1xf32>
    %cst_11 = arith.constant dense<0.000000e+00> : vector<2x1xf32>
    %25 = vector.multi_reduction <add>, %24, %cst_11 [1] : vector<2x8x1xf32> to vector<2x1xf32>
    %26 = vector.shape_cast %25 : vector<2x1xf32> to vector<2x1x1xf32>
    %27 = tpu.reciprocal %26 {approx = true} : vector<2x1x1xf32> -> vector<2x1x1xf32>
    %28 = vector.broadcast %27 : vector<2x1x1xf32> to vector<2x8x1xf32>
    %29 = arith.mulf %24, %28 : vector<2x8x1xf32>
    %c0_12 = arith.constant 0 : index
    %c0_13 = arith.constant 0 : index
    %c0_14 = arith.constant 0 : index
    %30 = vector.load %arg1[%c0_12, %c0_13, %c0_14] : memref<2x8x128xbf16, #tpu.memory_space<vmem>>, vector<2x8x128xbf16>
    %31 = arith.extf %30 : vector<2x8x128xbf16> to vector<2x8x128xf32>
    %32 = vector.broadcast %29 : vector<2x8x1xf32> to vector<2x8x128xf32>
    %33 = arith.mulf %32, %31 : vector<2x8x128xf32>
    %cst_15 = arith.constant dense<0.000000e+00> : vector<2x128xf32>
    %34 = vector.multi_reduction <add>, %33, %cst_15 [1] : vector<2x8x128xf32> to vector<2x128xf32>
    %c0_16 = arith.constant 0 : index
    %c0_17 = arith.constant 0 : index
    %35 = vector.load %arg6[%c0_16, %c0_17] : memref<2x128xf32, #tpu.memory_space<vmem>>, vector<2x128xf32>
    tpu.vector_store %arg6[%c0_16, %c0_17], %34 {strides = array<i32>} : memref<2x128xf32, #tpu.memory_space<vmem>>, vector<2x128xf32>,
    return
  }
  func.func @transform_0(%arg0: i32) -> (i32, i32, i32) {
    %c0_i32 = arith.constant 0 : i32
    %c0_i32_0 = arith.constant 0 : i32
    %c0_i32_1 = arith.constant 0 : i32
    return %arg0, %c0_i32, %c0_i32_0 : i32, i32, i32
  }
  func.func @transform_1(%arg0: i32) -> (i32, i32) {
    %c0_i32 = arith.constant 0 : i32
    %c0_i32_0 = arith.constant 0 : i32
    return %arg0, %c0_i32 : i32, i32
  }
  func.func @transform_2(%arg0: i32) -> (i32, i32) {
    %c0_i32 = arith.constant 0 : i32
    %c0_i32_0 = arith.constant 0 : i32
    %c0_i32_1 = arith.constant 0 : i32
    return %c0_i32, %c0_i32_0 : i32, i32
  }
  func.func @transform_3(%arg0: i32) -> (i32, i32) {
    %c0_i32 = arith.constant 0 : i32
    %c0_i32_0 = arith.constant 0 : i32
    %c0_i32_1 = arith.constant 0 : i32
    return %c0_i32, %c0_i32_0 : i32, i32
  }
  func.func @transform_4(%arg0: i32) -> i32 {
    %c0_i32 = arith.constant 0 : i32
    %c0_i32_0 = arith.constant 0 : i32
    return %c0_i32 : i32
  }
  func.func @transform_5(%arg0: i32) -> (i32, i32) {
    %c0_i32 = arith.constant 0 : i32
    %c0_i32_0 = arith.constant 0 : i32
    return %arg0, %c0_i32 : i32, i32
  }
}

</mosaic_0001>

<llo_original>
// kernel: tpu_custom_call.1
$region0: #{tpu_custom_call.1}
  #allocation0 [shape = 'u32[]', space=smem, size = 0x4, offset = 0x4, fixed_abs, tag = 'smem constant byte address 0x4 - core index']
  #allocation1 [shape = 'u32[144,128]{1,0:T(1,128)}', space=vmem, size = 0x12000, scoped, tag = 'internal scratch']
  #allocation2 [shape = 'f32[1]{0:T(128)S(6)}', space=smem, size = 0x200, scoped, tag = 'scoped memory for tpu_custom_call.1']
  %s0 = inlined_call_operand.hbm [shape: bf16[2,8,128], index: 0, kind: input, shape index: {}]
  %s1 = inlined_call_operand.vmem [shape: f32[2,128], index: 1, kind: input, shape index: {}]
  %s2 = inlined_call_operand.vmem [shape: f32[1,128], index: 2, kind: input, shape index: {}]
  %s3 = inlined_call_operand.vmem [shape: f32[1,128], index: 3, kind: input, shape index: {}]
  %s4 = inlined_call_operand.<no memory space> [shape: f32[1], index: 4, kind: input, shape index: {}]
  %s5 = inlined_call_operand.hbm [shape: f32[2,128], index: 5, kind: output, shape index: {}]
  %s6 = sld [smem:[#allocation0]]
  $region34: #{tpu_custom_call.1} parent=0
    _
  %s8 = ssub.s32 1, %s6
  %s9 = scalar_select 0, %s8, %s6
  %10 = sst [smem:[#allocation2]] %s4
  $region1: #{tpu_custom_call.1} parent=0
    #allocation3 [shape = 'u8[4096]{0}', space=vmem, size = 0x1000, scoped, tag = 'input window, operand 0, single buffered']
    #allocation4 [shape = 's32[1]{0}', space=sflag, size = 0x4, scoped, tag = 'scoped memory for tpu_custom_call.1']
    #allocation5 [shape = 's32[1]{0}', space=sflag, size = 0x4, scoped, tag = 'scoped memory for tpu_custom_call.1']
    #allocation6 [shape = 'u8[1024]{0}', space=vmem, size = 0x400, scoped, tag = 'output window, operand 0, single buffered']
    %11 = vsyncpa [#allocation4], 0
    %12 = vsyncpa [#allocation5], 0
    // Predicated region
    $region2: #{tpu_custom_call.1} parent=1 // pred_check
      _
    $region3: #{tpu_custom_call.1} parent=1 // pred_check_branch
      %14 = sbr.rel (0) target = $region5
    $region4: #{tpu_custom_call.1} parent=1 // pred_region
      %s16 = ssub.s32 128, 128
      %17 = vsyncadd [#allocation4], %s16
      %s18 = sshll.u32 [#allocation3], 4
      %s19 = int_to_ptr.vmem [resolvable:$true] %s18
      %24 = dma.hbm_to_vmem [thread:$0]  %s0, 128, %s19, [#allocation4], 64, 64, 4
    $region5: #{tpu_custom_call.1} parent=1 // pred_fallthru
      _
    // Predicated region
    $region6: #{tpu_custom_call.1} parent=1 // pred_check
      _
    $region7: #{tpu_custom_call.1} parent=1 // pred_check_branch
      %26 = sbr.rel (0) target = $region9
    $region8: #{tpu_custom_call.1} parent=1 // pred_region
      _
    $region9: #{tpu_custom_call.1} parent=1 // pred_fallthru
      _
    // Predicated region
    $region10: #{tpu_custom_call.1} parent=1 // pred_check
      _
    $region11: #{tpu_custom_call.1} parent=1 // pred_check_branch
      %28 = sbr.rel (0) target = $region13
    $region12: #{tpu_custom_call.1} parent=1 // pred_region
      _
    $region13: #{tpu_custom_call.1} parent=1 // pred_fallthru
      _
    // Predicated region
    $region14: #{tpu_custom_call.1} parent=1 // pred_check
      _
    $region15: #{tpu_custom_call.1} parent=1 // pred_check_branch
      %30 = sbr.rel (0) target = $region17
    $region16: #{tpu_custom_call.1} parent=1 // pred_region
      _
    $region17: #{tpu_custom_call.1} parent=1 // pred_fallthru
      _
    // Predicated region
    $region18: #{tpu_custom_call.1} parent=1 // pred_check
      _
    $region19: #{tpu_custom_call.1} parent=1 // pred_check_branch
      %32 = sbr.rel (0) target = $region21
    $region20: #{tpu_custom_call.1} parent=1 // pred_region
      _
    $region21: #{tpu_custom_call.1} parent=1 // pred_fallthru
      _
    // Predicated region
    $region22: #{tpu_custom_call.1} parent=1 // pred_check
      _
    $region23: #{tpu_custom_call.1} parent=1 // pred_check_branch
      %34 = sbr.rel (0) target = $region25
    $region24: #{tpu_custom_call.1} parent=1 // pred_region
      %35 = dma.done [#allocation4], 128
    $region25: #{tpu_custom_call.1} parent=1 // pred_fallthru
      _
    %v36 = vld [vmem:[#allocation3] sm:$0xf]
    %v37 = vld [vmem:[#allocation3 + $0x4] sm:$0xf]
    %v38 = vunpack.c.l.bf16 %v36
    %v39 = vunpack.c.l.bf16 %v37
    %v40 = vld [vmem:[%s2] sm:$0x1]
    %v42 = vlaneseq
    %v43 = vshrl.u32 %v42, 7
    %v44 = vsub.s32 0, %v43
    %v45 = vrot.slane %v40, %v44
    %v47 = vmul.f32 %v38, %v45
    %v48 = vmul.f32 %v39, %v45
    %49 = vadd.xlane.f32.xlu0 %v47
    %v50 = vpop.xlane.xlu0 %49
    %51 = vadd.xlane.f32.xlu0 %v48
    %v52 = vpop.xlane.xlu0 %51
    %v53 = vld [vmem:[%s1] sm:$0x3]
    %v54 = vld [vmem:[%s3] sm:$0x1]
    %v56 = vlaneseq
    %v57 = vshrl.u32 %v56, 7
    %v58 = vsub.s32 0, %v57
    %v59 = vrot.slane %v54, %v58
    %v61 = vmul.f32 %v53, %v59
    %vm62 = vcmask 1041408
    %v63 = vsel %vm62, %v61, 0.0
    %64 = vadd.xlane.f32.xlu0 %v63
    %v65 = vpop.xlane.xlu0 %64
    %s66 = sld [smem:[#allocation2]]
    %v67 = vstv %s66
    %v68 = vadd.f32 %v65, %v67
    %v70 = vlaneseq
    %v71 = vshrl.u32 %v70, 7
    %v72 = vsub.s32 0, %v71
    %v73 = vrot.slane %v68, %v72
    %v74 = vlaneseq
    %v75 = vshrl.u32 %v74, 7
    %v76 = vsub.s32 1, %v75
    %v77 = vrot.slane %v68, %v76
    %v80 = vadd.f32 %v50, %v73
    %v81 = vadd.f32 %v52, %v77
    %v82 = vrot.slane %v80, 4
    %v83 = vmax.f32 %v80, %v82
    %v84 = vrot.slane %v83, 2
    %v85 = vmax.f32 %v83, %v84
    %v86 = vrot.slane %v85, 1
    %v87 = vmax.f32 %v85, %v86
    %v88 = vrot.slane %v81, 4
    %v89 = vmax.f32 %v81, %v88
    %v90 = vrot.slane %v89, 2
    %v91 = vmax.f32 %v89, %v90
    %v92 = vrot.slane %v91, 1
    %v93 = vmax.f32 %v91, %v92
    %v94 = vsub.f32 %v80, %v87
    %v95 = vsub.f32 %v81, %v93
    %v96 = vmul.f32 %v94, 1.442695
    %v97 = vpow.pop %v96
    %v98 = vmul.f32 %v95, 1.442695
    %v99 = vpow.pop %v98
    %v100 = vrot.slane %v97, 4
    %v101 = vadd.f32 %v97, %v100
    %v102 = vrot.slane %v101, 2
    %v103 = vadd.f32 %v101, %v102
    %v104 = vrot.slane %v103, 1
    %v105 = vadd.f32 %v103, %v104
    %v106 = vrot.slane %v99, 4
    %v107 = vadd.f32 %v99, %v106
    %v108 = vrot.slane %v107, 2
    %v109 = vadd.f32 %v107, %v108
    %v110 = vrot.slane %v109, 1
    %v111 = vadd.f32 %v109, %v110
    %v112 = vrcp.pop %v105
    %v113 = vrcp.pop %v111
    %v114 = vmul.f32 %v97, %v112
    %v115 = vmul.f32 %v99, %v113
    %v116 = vmul.f32 %v114, %v38
    %v117 = vmul.f32 %v115, %v39
    %v118 = vrot.slane %v116, 4
    %v119 = vadd.f32 %v116, %v118
    %v120 = vrot.slane %v119, 2
    %v121 = vadd.f32 %v119, %v120
    %v122 = vrot.slane %v121, 1
    %v123 = vadd.f32 %v121, %v122
    %v124 = vrot.slane %v117, 4
    %v125 = vadd.f32 %v117, %v124
    %v126 = vrot.slane %v125, 2
    %v127 = vadd.f32 %v125, %v126
    %v128 = vrot.slane %v127, 1
    %v129 = vadd.f32 %v127, %v128
    %vm132 = vcmask 1041409
    %v133 = vsel %vm132, %v129, %v123
    %135 = vst [vmem:[#allocation6] sm:$0x3] %v133
    // Predicated region
    $region26: #{tpu_custom_call.1} parent=1 // pred_check
      _
    $region27: #{tpu_custom_call.1} parent=1 // pred_check_branch
      %137 = sbr.rel (0) target = $region29
    $region28: #{tpu_custom_call.1} parent=1 // pred_region
      %s139 = ssub.s32 32, 32
      %140 = vsyncadd [#allocation5], %s139
      %s142 = sshll.u32 [#allocation6], 4
      %s143 = int_to_ptr.vmem [resolvable:$true] %s142
      %145 = dma.vmem_to_hbm [thread:$0]  %s143, 32, %s5, [#allocation5]
    $region29: #{tpu_custom_call.1} parent=1 // pred_fallthru
      _
    // Predicated region
    $region30: #{tpu_custom_call.1} parent=1 // pred_check
      _
    $region31: #{tpu_custom_call.1} parent=1 // pred_check_branch
      %147 = sbr.rel (0) target = $region33
    $region32: #{tpu_custom_call.1} parent=1 // pred_region
      %148 = dma.done [#allocation5], 32
    $region33: #{tpu_custom_call.1} parent=1 // pred_fallthru
      _
    %149 = vsyncpa [#allocation4], 1
    %150 = vsyncpa [#allocation5], 1

</llo_original>
